<compile_context>
chip_gen: v7x
topology: tpu7x:2x2x1
jax: 0.10.0
libtpu: 0.0.40
codegen_flags: <defaults>
</compile_context>

<pallas_src>
import jax
import jax.numpy as jnp
from jax.experimental import pallas as pl
from jax.experimental.pallas import tpu as pltpu


def _detect_kernel(x_ref, w_ref, b_ref, o_ref):
    # x_ref: (bblk, Cin, thw)   activation tile, H*W on the lane axis
    # w_ref: (Cout, Cin)        conv weight in native layout (no transpose needed)
    # b_ref: (Cout, 1)          f32 bias column
    # o_ref: (bblk, Cout, thw)  output tile, H*W on the lane axis (lane-dense store)
    w = w_ref[...]
    bias = b_ref[...]
    # bblk is small (<=8) and static: unrolled loop keeps every matmul a plain
    # 2-D MXU op with no in-kernel relayouts.
    for i in range(x_ref.shape[0]):
        acc = jnp.dot(w, x_ref[i], preferred_element_type=jnp.float32)
        o_ref[i] = (acc + bias).astype(o_ref.dtype)


def _round_up(x, m):
    return (x + m - 1) // m * m


def detect_forward(x_nchw, weight, bias, *, thw=2048, max_bblk=8):
    """1x1 conv with bias; returns NHWC (== conv(x).permute([0, 2, 3, 1])).

    x_nchw: (B, Cin, H, W)
    weight: (Cout, Cin, 1, 1) as stored by nn.Conv2d, or already-squeezed (Cout, Cin)
    bias:   (Cout,)
    """
    B, Cin, H, W = x_nchw.shape
    w2 = weight.reshape(weight.shape[0], Cin)        # accept (Cout,Cin,1,1) or (Cout,Cin)
    Cout = w2.shape[0]
    HW = H * W
    LANE = 128
    dtype = x_nchw.dtype
    itemsize = jnp.dtype(dtype).itemsize

    # Spatial tile: as big as possible (lane-dense, multiple of 128), capped by a
    # double-buffered VMEM budget that leaves headroom on every generation.
    thw = min(_round_up(max(int(thw), LANE), LANE), _round_up(HW, LANE))

    def _step_vmem_bytes(t, bb):
        # double-buffered input + output tiles (+ tiny weight & bias, also 2x)
        return 2 * (bb * (Cin + Cout) * t * itemsize
                    + Cout * Cin * itemsize + Cout * 4)

    VMEM_TILE_BUDGET = 24 * 2**20    # safe vs v7x 64 MiB physical / 32 MiB scoped
    while thw > LANE and _step_vmem_bytes(thw, 1) > VMEM_TILE_BUDGET:
        thw = _round_up(thw // 2, LANE)

    hw_pad = _round_up(HW, thw)
    n_t = hw_pad // thw

    # Fold several batch rows into one grid step when tiles are small; amortizes
    # the ~0.35us per-step overhead for tiny H*W, no-op for large H*W.
    bblk = 1
    for cand in range(min(B, max_bblk), 0, -1):
        if B % cand == 0 and _step_vmem_bytes(thw, cand) <= VMEM_TILE_BUDGET:
            bblk = cand
            break

    # Free reshape (NCHW is contiguous over H*W); pad only if HW % thw != 0.
    x3 = x_nchw.reshape(B, Cin, HW)
    if hw_pad != HW:
        x3 = jnp.pad(x3, ((0, 0), (0, 0), (0, hw_pad - HW)))

    w2 = w2.astype(dtype)                            # (Cout, Cin), native layout
    b2 = bias.astype(jnp.float32).reshape(Cout, 1)   # f32 bias column

    grid = (B // bblk, n_t)
    vmem_limit = int(min(48 * 2**20,
                         max(32 * 2**20, 2 * _step_vmem_bytes(thw, bblk))))

    cost = pl.CostEstimate(
        flops=2 * B * Cout * Cin * HW + B * Cout * HW,
        transcendentals=0,
        bytes_accessed=(B * Cin * HW * itemsize + Cout * Cin * itemsize
                        + Cout * 4 + B * Cout * HW * itemsize),
    )

    out = pl.pallas_call(
        _detect_kernel,
        out_shape=jax.ShapeDtypeStruct((B, Cout, hw_pad), dtype),
        grid_spec=pltpu.PrefetchScalarGridSpec(
            num_scalar_prefetch=0,
            grid=grid,
            in_specs=[
                pl.BlockSpec((bblk, Cin, thw), lambda bb, t: (bb, 0, t)),
                # weight & bias are grid-invariant and tiny; constant index maps
                # mean they are not re-fetched between steps.
                pl.BlockSpec((Cout, Cin), lambda bb, t: (0, 0)),
                pl.BlockSpec((Cout, 1), lambda bb, t: (0, 0)),
            ],
            out_specs=pl.BlockSpec((bblk, Cout, thw), lambda bb, t: (bb, 0, t)),
        ),
        compiler_params=pltpu.CompilerParams(
            dimension_semantics=("parallel", "parallel"),
            vmem_limit_bytes=vmem_limit,
        ),
        cost_estimate=cost,
    )(x3, w2, b2)

    out = out[:, :, :HW].reshape(B, Cout, H, W)
    # NHWC permute on the output tensor (small Cout => cheaper here than forcing
    # Cout-wide masked stores inside the kernel).
    return jnp.transpose(out, (0, 2, 3, 1))


if __name__ == "__main__":
    # Small shapes consistent with the module: batch=2, in_channels=4, 16x16 spatial.
    B, Cin, H, W = 2, 4, 16, 16
    Cout = 8

    key = jax.random.PRNGKey(0)
    kx, kw, kb = jax.random.split(key, 3)

    x = jax.random.normal(kx, (B, Cin, H, W), dtype=jnp.float32)
    # nn.Conv2d(in, out, 1) weight layout: (Cout, Cin, 1, 1).
    weight = jax.random.normal(kw, (Cout, Cin, 1, 1), dtype=jnp.float32) * 0.1
    bias = jax.random.normal(kb, (Cout,), dtype=jnp.float32) * 0.1

    fwd = jax.jit(detect_forward)
    out = jax.block_until_ready(fwd(x, weight, bias))

    # Reference: plain-JAX 1x1 conv + permute semantics.
    ref = jnp.einsum("bchw,oc->bhwo", x, weight.reshape(Cout, Cin),
                     precision=jax.lax.Precision.HIGHEST) + bias[None, None, None, :]
    assert out.shape == (B, H, W, Cout), out.shape
    assert jnp.allclose(out, ref, atol=1e-5, rtol=1e-5), "mismatch vs reference"

    print("KERNEL_OK")
</pallas_src>

<mosaic_0001>
module attributes {stable_mosaic.version = 11 : i64} {
  func.func @_detect_kernel(%arg0: i32, %arg1: i32, %arg2: memref<2x4x256xf32, #tpu.memory_space<vmem>>, %arg3: memref<8x4xf32, #tpu.memory_space<vmem>>, %arg4: memref<8x1xf32, #tpu.memory_space<vmem>>, %arg5: memref<2x8x256xf32, #tpu.memory_space<vmem>>) attributes {dimension_semantics = [#tpu.dimension_semantics<parallel>, #tpu.dimension_semantics<parallel>], iteration_bounds = array<i64: 1, 1>, scalar_prefetch = 0 : i64, scratch_operands = 0 : i64, tpu.core_type = #tpu.core_type<tc>, window_params = [{transform_indices = @transform_0, window_bounds = array<i64: 2, 4, 256>}, {pipeline_mode = #tpu.pipeline_mode<synchronous>, transform_indices = @transform_1, window_bounds = array<i64: 8, 4>}, {pipeline_mode = #tpu.pipeline_mode<synchronous>, transform_indices = @transform_2, window_bounds = array<i64: 8, 1>}, {transform_indices = @transform_3, window_bounds = array<i64: 2, 8, 256>}]} {
    %c0 = arith.constant 0 : index
    %c0_0 = arith.constant 0 : index
    %0 = vector.load %arg3[%c0, %c0_0] : memref<8x4xf32, #tpu.memory_space<vmem>>, vector<8x4xf32>
    %c0_1 = arith.constant 0 : index
    %c0_2 = arith.constant 0 : index
    %1 = vector.load %arg4[%c0_1, %c0_2] : memref<8x1xf32, #tpu.memory_space<vmem>>, vector<8x1xf32>
    %c0_3 = arith.constant 0 : index
    %c0_4 = arith.constant 0 : index
    %c0_5 = arith.constant 0 : index
    %2 = vector.load %arg2[%c0_3, %c0_4, %c0_5] : memref<2x4x256xf32, #tpu.memory_space<vmem>>, vector<1x4x256xf32>
    %3 = vector.shape_cast %2 : vector<1x4x256xf32> to vector<4x256xf32>
    %cst = arith.constant dense<0.000000e+00> : vector<8x256xf32>
    %4 = tpu.matmul %0, %3, %cst {dimension_numbers = #tpu.dot_dimension_numbers<[1], [0], [0], [1], [0, 0, 1, 1], [], []>} : vector<8x4xf32>, vector<4x256xf32>, vector<8x256xf32> -> vector<8x256xf32>
    %5 = vector.broadcast %1 : vector<8x1xf32> to vector<8x256xf32>
    %6 = arith.addf %4, %5 : vector<8x256xf32>
    %c0_6 = arith.constant 0 : index
    %c0_7 = arith.constant 0 : index
    %c0_8 = arith.constant 0 : index
    %7 = vector.load %arg5[%c0_6, %c0_7, %c0_8] : memref<2x8x256xf32, #tpu.memory_space<vmem>>, vector<1x8x256xf32>
    %8 = vector.shape_cast %7 : vector<1x8x256xf32> to vector<8x256xf32>
    %9 = vector.shape_cast %6 : vector<8x256xf32> to vector<1x8x256xf32>
    tpu.vector_store %arg5[%c0_6, %c0_7, %c0_8], %9 {strides = array<i32>} : memref<2x8x256xf32, #tpu.memory_space<vmem>>, vector<1x8x256xf32>,
    %c1 = arith.constant 1 : index
    %c0_9 = arith.constant 0 : index
    %c0_10 = arith.constant 0 : index
    %10 = vector.load %arg2[%c1, %c0_9, %c0_10] : memref<2x4x256xf32, #tpu.memory_space<vmem>>, vector<1x4x256xf32>
    %11 = vector.shape_cast %10 : vector<1x4x256xf32> to vector<4x256xf32>
    %cst_11 = arith.constant dense<0.000000e+00> : vector<8x256xf32>
    %12 = tpu.matmul %0, %11, %cst_11 {dimension_numbers = #tpu.dot_dimension_numbers<[1], [0], [0], [1], [0, 0, 1, 1], [], []>} : vector<8x4xf32>, vector<4x256xf32>, vector<8x256xf32> -> vector<8x256xf32>
    %13 = vector.broadcast %1 : vector<8x1xf32> to vector<8x256xf32>
    %14 = arith.addf %12, %13 : vector<8x256xf32>
    %c1_12 = arith.constant 1 : index
    %c0_13 = arith.constant 0 : index
    %c0_14 = arith.constant 0 : index
    %15 = vector.load %arg5[%c1_12, %c0_13, %c0_14] : memref<2x8x256xf32, #tpu.memory_space<vmem>>, vector<1x8x256xf32>
    %16 = vector.shape_cast %15 : vector<1x8x256xf32> to vector<8x256xf32>
    %17 = vector.shape_cast %14 : vector<8x256xf32> to vector<1x8x256xf32>
    tpu.vector_store %arg5[%c1_12, %c0_13, %c0_14], %17 {strides = array<i32>} : memref<2x8x256xf32, #tpu.memory_space<vmem>>, vector<1x8x256xf32>,
    return
  }
  func.func @transform_0(%arg0: i32, %arg1: i32) -> (i32, i32, i32) {
    %c0_i32 = arith.constant 0 : i32
    %c0_i32_0 = arith.constant 0 : i32
    return %arg0, %c0_i32, %arg1 : i32, i32, i32
  }
  func.func @transform_1(%arg0: i32, %arg1: i32) -> (i32, i32) {
    %c0_i32 = arith.constant 0 : i32
    %c0_i32_0 = arith.constant 0 : i32
    %c0_i32_1 = arith.constant 0 : i32
    return %c0_i32, %c0_i32_0 : i32, i32
  }
  func.func @transform_2(%arg0: i32, %arg1: i32) -> (i32, i32) {
    %c0_i32 = arith.constant 0 : i32
    %c0_i32_0 = arith.constant 0 : i32
    %c0_i32_1 = arith.constant 0 : i32
    return %c0_i32, %c0_i32_0 : i32, i32
  }
  func.func @transform_3(%arg0: i32, %arg1: i32) -> (i32, i32, i32) {
    %c0_i32 = arith.constant 0 : i32
    %c0_i32_0 = arith.constant 0 : i32
    return %arg0, %c0_i32, %arg1 : i32, i32, i32
  }
}

</mosaic_0001>

<llo_original>
// kernel: detect_forward.1
$region0: #{detect_forward.1}
  #allocation0 [shape = 'u32[]', space=smem, size = 0x4, offset = 0x4, fixed_abs, tag = 'smem constant byte address 0x4 - core index']
  #allocation1 [shape = 'u32[144,128]{1,0:T(1,128)}', space=vmem, size = 0x12000, scoped, tag = 'internal scratch']
  %s0 = inlined_call_operand.vmem [shape: f32[2,4,256], index: 0, kind: input, shape index: {}]
  %s1 = inlined_call_operand.vmem [shape: f32[8,4], index: 1, kind: input, shape index: {}]
  %s2 = inlined_call_operand.vmem [shape: f32[8,1], index: 2, kind: input, shape index: {}]
  %s3 = inlined_call_operand.vmem [shape: f32[2,8,256], index: 3, kind: output, shape index: {}]
  %s4 = sld [smem:[#allocation0]]
  $region22: #{detect_forward.1} parent=0
    _
  %s6 = ssub.s32 1, %s4
  %s7 = scalar_select 0, %s6, %s4
  // Predicated region
  $region2: #{detect_forward.1} parent=0 // pred_check
    _
  $region3: #{detect_forward.1} parent=0 // pred_check_branch
    %9 = sbr.rel (0) target = $region5
  $region4: #{detect_forward.1} parent=0 // pred_region
    _
  $region5: #{detect_forward.1} parent=0 // pred_fallthru
    _
  // Predicated region
  $region6: #{detect_forward.1} parent=0 // pred_check
    _
  $region7: #{detect_forward.1} parent=0 // pred_check_branch
    %11 = sbr.rel (0) target = $region9
  $region8: #{detect_forward.1} parent=0 // pred_region
    _
  $region9: #{detect_forward.1} parent=0 // pred_fallthru
    _
  // Predicated region
  $region10: #{detect_forward.1} parent=0 // pred_check
    _
  $region11: #{detect_forward.1} parent=0 // pred_check_branch
    %13 = sbr.rel (0) target = $region13
  $region12: #{detect_forward.1} parent=0 // pred_region
    _
  $region13: #{detect_forward.1} parent=0 // pred_fallthru
    _
  %v14 = vld [vmem:[%s1] sm:$0xff]
  %v15 = vld [vmem:[%s2] sm:$0xff]
  %v16 = vld [vmem:[%s0] sm:$0xff]
  %18 = vset.pattern.permute.xlu0 0
  %19 = vperm.xlu0 %18, %v15
  %v20 = vpop.permute.xlu0 %19
  %v23 = vcombine.high %v16, %v16
  %vm24 = vcmask 31744
  %v26 = vsel %vm24, %v14, 0
  %vm28 = vcmask 1043456
  %v29 = vsel %vm28, %v16, 0
  %v31 = vsel %vm28, %v23, 0
  %33 = vmatprep.subr.mxu0 %v31
  %34 = vmatpush1.msra.mxu0 %v29
  %35 = vmatprep.subr.mxu0 0.0
  %36 = vmatpush1.msra.mxu0 0.0
  %37 = vmatprep.subr.mxu0 0.0
  %38 = vmatpush1.msra.mxu0 0.0
  %39 = vmatprep.subr.mxu0 0.0
  %40 = vmatpush1.msra.mxu0 0.0
  %41 = vmatprep.subr.mxu0 0.0
  %42 = vmatpush1.msra.mxu0 0.0
  %43 = vmatprep.subr.mxu0 0.0
  %44 = vmatpush1.msra.mxu0 0.0
  %45 = vmatprep.subr.mxu0 0.0
  %46 = vmatpush1.msra.mxu0 0.0
  %47 = vmatprep.subr.mxu0 0.0
  %48 = vmatpush1.msra.mxu0 0.0
  %49 = vmatprep.subr.mxu0 0.0
  %50 = vmatpush1.msra.mxu0 0.0
  %51 = vmatprep.subr.mxu0 0.0
  %52 = vmatpush1.msra.mxu0 0.0
  %53 = vmatprep.subr.mxu0 0.0
  %54 = vmatpush1.msra.mxu0 0.0
  %55 = vmatprep.subr.mxu0 0.0
  %56 = vmatpush1.msra.mxu0 0.0
  %57 = vmatprep.subr.mxu0 0.0
  %58 = vmatpush1.msra.mxu0 0.0
  %59 = vmatprep.subr.mxu0 0.0
  %60 = vmatpush1.msra.mxu0 0.0
  %61 = vmatprep.subr.mxu0 0.0
  %62 = vmatpush1.msra.mxu0 0.0
  %63 = vmatprep.subr.mxu0 0.0
  %64 = vmatpush1.msra.mxu0 0.0
  %65 = vmatprep.subr.mxu0 0.0
  %66 = vmatpush1.msra.mxu0 0.0
  %67 = vmatprep.subr.mxu0 0.0
  %68 = vmatpush1.msra.mxu0 0.0
  %69 = vmatprep.subr.mxu0 0.0
  %70 = vmatpush1.msra.mxu0 0.0
  %71 = vmatprep.subr.mxu0 0.0
  %72 = vmatpush1.msra.mxu0 0.0
  %73 = vmatprep.subr.mxu0 0.0
  %74 = vmatpush1.msra.mxu0 0.0
  %75 = vmatprep.subr.mxu0 0.0
  %76 = vmatpush1.msra.mxu0 0.0
  %77 = vmatprep.subr.mxu0 0.0
  %78 = vmatpush1.msra.mxu0 0.0
  %79 = vmatprep.subr.mxu0 0.0
  %80 = vmatpush1.msra.mxu0 0.0
  %81 = vmatprep.subr.mxu0 0.0
  %82 = vmatpush1.msra.mxu0 0.0
  %83 = vmatprep.subr.mxu0 0.0
  %84 = vmatpush1.msra.mxu0 0.0
  %85 = vmatprep.subr.mxu0 0.0
  %86 = vmatpush1.msra.mxu0 0.0
  %87 = vmatprep.subr.mxu0 0.0
  %88 = vmatpush1.msra.mxu0 0.0
  %89 = vmatprep.subr.mxu0 0.0
  %90 = vmatpush1.msra.mxu0 0.0
  %91 = vmatprep.subr.mxu0 0.0
  %92 = vmatpush1.msra.mxu0 0.0
  %93 = vmatprep.subr.mxu0 0.0
  %94 = vmatpush1.msra.mxu0 0.0
  %95 = vmatprep.subr.mxu0 0.0
  %96 = vmatpush1.msra.mxu0 0.0
  %97 = vmatprep.mubr.f32.mxu0 0.0
  %98 = vmatmul.mubr.f32.gmra.mrb[0].mxu0 %v26
  %v99 = vpop.f32.mrb[0].mxu0
  %v100 = vadd.f32 %v20, %v99
  %v101 = vpop.f32.mrb[0].mxu0
  %v102 = vadd.f32 %v20, %v101
  %103 = vdwg.mxu0
  %104 = vst [vmem:[%s3] sm:$0xff] %v100
  %105 = vst [vmem:[%s3 + $0x8] sm:$0xff] %v102
  %s106 = scalar_lea.vmem %s0, 8
  %v107 = vld [vmem:[%s106] sm:$0xff]
  %v109 = vcombine.high %v107, %v107
  %v110 = vsel %vm28, %v107, 0
  %v112 = vsel %vm28, %v109, 0
  %114 = vmatprep.subr.mxu0 %v112
  %115 = vmatpush1.msra.mxu0 %v110
  %116 = vmatprep.subr.mxu0 0.0
  %117 = vmatpush1.msra.mxu0 0.0
  %118 = vmatprep.subr.mxu0 0.0
  %119 = vmatpush1.msra.mxu0 0.0
  %120 = vmatprep.subr.mxu0 0.0
  %121 = vmatpush1.msra.mxu0 0.0
  %122 = vmatprep.subr.mxu0 0.0
  %123 = vmatpush1.msra.mxu0 0.0
  %124 = vmatprep.subr.mxu0 0.0
  %125 = vmatpush1.msra.mxu0 0.0
  %126 = vmatprep.subr.mxu0 0.0
  %127 = vmatpush1.msra.mxu0 0.0
  %128 = vmatprep.subr.mxu0 0.0
  %129 = vmatpush1.msra.mxu0 0.0
  %130 = vmatprep.subr.mxu0 0.0
  %131 = vmatpush1.msra.mxu0 0.0
  %132 = vmatprep.subr.mxu0 0.0
  %133 = vmatpush1.msra.mxu0 0.0
  %134 = vmatprep.subr.mxu0 0.0
  %135 = vmatpush1.msra.mxu0 0.0
  %136 = vmatprep.subr.mxu0 0.0
  %137 = vmatpush1.msra.mxu0 0.0
  %138 = vmatprep.subr.mxu0 0.0
  %139 = vmatpush1.msra.mxu0 0.0
  %140 = vmatprep.subr.mxu0 0.0
  %141 = vmatpush1.msra.mxu0 0.0
  %142 = vmatprep.subr.mxu0 0.0
  %143 = vmatpush1.msra.mxu0 0.0
  %144 = vmatprep.subr.mxu0 0.0
  %145 = vmatpush1.msra.mxu0 0.0
  %146 = vmatprep.subr.mxu0 0.0
  %147 = vmatpush1.msra.mxu0 0.0
  %148 = vmatprep.subr.mxu0 0.0
  %149 = vmatpush1.msra.mxu0 0.0
  %150 = vmatprep.subr.mxu0 0.0
  %151 = vmatpush1.msra.mxu0 0.0
  %152 = vmatprep.subr.mxu0 0.0
  %153 = vmatpush1.msra.mxu0 0.0
  %154 = vmatprep.subr.mxu0 0.0
  %155 = vmatpush1.msra.mxu0 0.0
  %156 = vmatprep.subr.mxu0 0.0
  %157 = vmatpush1.msra.mxu0 0.0
  %158 = vmatprep.subr.mxu0 0.0
  %159 = vmatpush1.msra.mxu0 0.0
  %160 = vmatprep.subr.mxu0 0.0
  %161 = vmatpush1.msra.mxu0 0.0
  %162 = vmatprep.subr.mxu0 0.0
  %163 = vmatpush1.msra.mxu0 0.0
  %164 = vmatprep.subr.mxu0 0.0
  %165 = vmatpush1.msra.mxu0 0.0
  %166 = vmatprep.subr.mxu0 0.0
  %167 = vmatpush1.msra.mxu0 0.0
  %168 = vmatprep.subr.mxu0 0.0
  %169 = vmatpush1.msra.mxu0 0.0
  %170 = vmatprep.subr.mxu0 0.0
  %171 = vmatpush1.msra.mxu0 0.0
  %172 = vmatprep.subr.mxu0 0.0
  %173 = vmatpush1.msra.mxu0 0.0
  %174 = vmatprep.subr.mxu0 0.0
  %175 = vmatpush1.msra.mxu0 0.0
  %176 = vmatprep.subr.mxu0 0.0
  %177 = vmatpush1.msra.mxu0 0.0
  %178 = vmatprep.mubr.f32.mxu0 0.0
  %179 = vmatmul.mubr.f32.gmra.mrb[0].mxu0 %v26
  %v180 = vpop.f32.mrb[0].mxu0
  %v181 = vadd.f32 %v20, %v180
  %v182 = vpop.f32.mrb[0].mxu0
  %v183 = vadd.f32 %v20, %v182
  %184 = vdwg.mxu0
  %s185 = scalar_lea.vmem %s3, 16
  %186 = vst [vmem:[%s185] sm:$0xff] %v181
  %187 = vst [vmem:[%s185 + $0x8] sm:$0xff] %v183
  // Predicated region
  $region14: #{detect_forward.1} parent=0 // pred_check
    _
  $region15: #{detect_forward.1} parent=0 // pred_check_branch
    %189 = sbr.rel (0) target = $region17
  $region16: #{detect_forward.1} parent=0 // pred_region
    _
  $region17: #{detect_forward.1} parent=0 // pred_fallthru
    _
  // Predicated region
  $region18: #{detect_forward.1} parent=0 // pred_check
    _
  $region19: #{detect_forward.1} parent=0 // pred_check_branch
    %191 = sbr.rel (0) target = $region21
  $region20: #{detect_forward.1} parent=0 // pred_region
    _
  $region21: #{detect_forward.1} parent=0 // pred_fallthru
    _

</llo_original>
